<compile_context>
chip_gen: v7x
topology: tpu7x:2x2x1
jax: 0.10.0
libtpu: 0.0.40
codegen_flags: <defaults>
</compile_context>

<pallas_src>
import functools

import jax
import jax.numpy as jnp
from jax.experimental import pallas as pl
from jax.experimental.pallas import tpu as pltpu


def _round_up(x: int, m: int) -> int:
    return ((x + m - 1) // m) * m


def _residual_linear_kernel(xk_ref, xr_ref, w_ref, b_ref, o_ref, *, factor):
    """One (tm, tn) output tile of: (x @ W + b) * factor + x."""
    # Matmul in the operands' native dtype; accumulate in f32 on the MXU.
    y = jnp.dot(xk_ref[...], w_ref[...], preferred_element_type=jnp.float32)
    y = y + b_ref[...].astype(jnp.float32)                 # broadcast (1, tn)
    out = y * factor + xr_ref[...].astype(jnp.float32)     # residual epilogue
    o_ref[...] = out.astype(o_ref.dtype)


def residual_module(x, w, b, factor: float = 1.0, *, tm: int = 256, tn: int = 512):
    """x: (B, S, H). w: (H, H) laid out (in, out). b: (H,).

    Returns (x @ w + b) * factor + x, computed with a tiled Pallas kernel.
    """
    B, S, H = x.shape
    rows = B * S

    # --- tile sizing -------------------------------------------------------
    H_p = _round_up(H, 128)                       # lane-dense output stores
    tm_eff = max(8, min(_round_up(tm, 8), _round_up(rows, 8)))
    rows_p = _round_up(rows, tm_eff)

    tn_eff = max(128, (min(tn, H_p) // 128) * 128)
    while H_p % tn_eff:                           # tn must divide padded H
        tn_eff -= 128

    # --- pad operands (zeros keep the math exact; padding sliced off) ------
    x2d = x.reshape(rows, H)
    if (rows_p, H_p) != (rows, H):
        x2d = jnp.pad(x2d, ((0, rows_p - rows), (0, H_p - H)))
    w_p = w if (H_p == H) else jnp.pad(w, ((0, H_p - H), (0, H_p - H)))
    b_p = b if (H_p == H) else jnp.pad(b, (0, H_p - H))
    b2d = b_p.reshape(1, H_p)

    grid = (rows_p // tm_eff, H_p // tn_eff)

    # --- VMEM budget (double-buffered tiles), capped so it is v7x-safe -----
    xb, wb, ob = x2d.dtype.itemsize, w_p.dtype.itemsize, x.dtype.itemsize
    est = (2 * tm_eff * H_p * xb        # x K-panel
           + 2 * tm_eff * tn_eff * xb   # x residual tile
           + 2 * H_p * tn_eff * wb      # weight panel
           + 2 * tn_eff * 4             # bias
           + 2 * tm_eff * tn_eff * ob)  # output tile
    vmem_limit = int(min(max(int(1.3 * est), 32 * 1024 * 1024), 64 * 1024 * 1024))

    kernel = functools.partial(_residual_linear_kernel, factor=float(factor))

    out2d = pl.pallas_call(
        kernel,
        out_shape=jax.ShapeDtypeStruct((rows_p, H_p), x.dtype),
        grid_spec=pltpu.PrefetchScalarGridSpec(
            num_scalar_prefetch=0,
            grid=grid,
            in_specs=[
                # full-K row panel of x for the matmul (revisited across j)
                pl.BlockSpec((tm_eff, H_p), lambda i, j: (i, 0)),
                # matching (tm, tn) slice of x for the residual add
                pl.BlockSpec((tm_eff, tn_eff), lambda i, j: (i, j)),
                # (K, tn) weight panel
                pl.BlockSpec((H_p, tn_eff), lambda i, j: (0, j)),
                # (1, tn) bias slice
                pl.BlockSpec((1, tn_eff), lambda i, j: (0, j)),
            ],
            out_specs=pl.BlockSpec((tm_eff, tn_eff), lambda i, j: (i, j)),
        ),
        compiler_params=pltpu.CompilerParams(
            dimension_semantics=("parallel", "parallel"),
            vmem_limit_bytes=vmem_limit,
        ),
    )(x2d, x2d, w_p, b2d)

    return out2d[:rows, :H].reshape(B, S, H)


def _reference(x, w, b, factor):
    return (jnp.einsum("bsh,ho->bso", x, w) + b) * factor + x


if __name__ == "__main__":
    key = jax.random.PRNGKey(0)
    kx, kw, kb = jax.random.split(key, 3)

    B, S, H = 2, 8, 32
    factor = 0.5

    x = jax.random.normal(kx, (B, S, H), dtype=jnp.float32)
    # Deterministic parameter init (synthetic; no checkpoint load).
    w = jax.random.normal(kw, (H, H), dtype=jnp.float32) * 0.05   # (in, out)
    b = jax.random.normal(kb, (H,), dtype=jnp.float32) * 0.01

    out = residual_module(x, w, b, factor)
    out = jax.block_until_ready(out)

    ref = _reference(x, w, b, factor)
    assert out.shape == (B, S, H)
    assert jnp.allclose(out, ref, atol=1e-5, rtol=1e-5), "mismatch vs reference"

    print("KERNEL_OK")
</pallas_src>

<mosaic_0001>
module attributes {stable_mosaic.version = 11 : i64} {
  func.func @_residual_linear_kernel(%arg0: i32, %arg1: i32, %arg2: memref<16x128xf32, #tpu.memory_space<vmem>>, %arg3: memref<16x128xf32, #tpu.memory_space<vmem>>, %arg4: memref<128x128xf32, #tpu.memory_space<vmem>>, %arg5: memref<1x128xf32, #tpu.memory_space<vmem>>, %arg6: memref<16x128xf32, #tpu.memory_space<vmem>>) attributes {dimension_semantics = [#tpu.dimension_semantics<parallel>, #tpu.dimension_semantics<parallel>], iteration_bounds = array<i64: 1, 1>, scalar_prefetch = 0 : i64, scratch_operands = 0 : i64, tpu.core_type = #tpu.core_type<tc>, window_params = [{transform_indices = @transform_0, window_bounds = array<i64: 16, 128>}, {transform_indices = @transform_1, window_bounds = array<i64: 16, 128>}, {transform_indices = @transform_2, window_bounds = array<i64: 128, 128>}, {transform_indices = @transform_3, window_bounds = array<i64: 1, 128>}, {transform_indices = @transform_4, window_bounds = array<i64: 16, 128>}]} {
    %c0 = arith.constant 0 : index
    %c0_0 = arith.constant 0 : index
    %0 = vector.load %arg2[%c0, %c0_0] : memref<16x128xf32, #tpu.memory_space<vmem>>, vector<16x128xf32>
    %c0_1 = arith.constant 0 : index
    %c0_2 = arith.constant 0 : index
    %1 = vector.load %arg4[%c0_1, %c0_2] : memref<128x128xf32, #tpu.memory_space<vmem>>, vector<128x128xf32>
    %cst = arith.constant dense<0.000000e+00> : vector<16x128xf32>
    %2 = tpu.matmul %0, %1, %cst {dimension_numbers = #tpu.dot_dimension_numbers<[1], [0], [0], [1], [0, 0, 1, 1], [], []>} : vector<16x128xf32>, vector<128x128xf32>, vector<16x128xf32> -> vector<16x128xf32>
    %c0_3 = arith.constant 0 : index
    %c0_4 = arith.constant 0 : index
    %3 = vector.load %arg5[%c0_3, %c0_4] : memref<1x128xf32, #tpu.memory_space<vmem>>, vector<1x128xf32>
    %4 = vector.broadcast %3 : vector<1x128xf32> to vector<16x128xf32>
    %5 = arith.addf %2, %4 : vector<16x128xf32>
    %cst_5 = arith.constant 5.000000e-01 : f32
    %6 = vector.broadcast %cst_5 : f32 to vector<16x128xf32>
    %7 = arith.mulf %5, %6 : vector<16x128xf32>
    %c0_6 = arith.constant 0 : index
    %c0_7 = arith.constant 0 : index
    %8 = vector.load %arg3[%c0_6, %c0_7] : memref<16x128xf32, #tpu.memory_space<vmem>>, vector<16x128xf32>
    %9 = arith.addf %7, %8 : vector<16x128xf32>
    %c0_8 = arith.constant 0 : index
    %c0_9 = arith.constant 0 : index
    %10 = vector.load %arg6[%c0_8, %c0_9] : memref<16x128xf32, #tpu.memory_space<vmem>>, vector<16x128xf32>
    tpu.vector_store %arg6[%c0_8, %c0_9], %9 {strides = array<i32>} : memref<16x128xf32, #tpu.memory_space<vmem>>, vector<16x128xf32>,
    return
  }
  func.func @transform_0(%arg0: i32, %arg1: i32) -> (i32, i32) {
    %c0_i32 = arith.constant 0 : i32
    %c0_i32_0 = arith.constant 0 : i32
    return %arg0, %c0_i32 : i32, i32
  }
  func.func @transform_1(%arg0: i32, %arg1: i32) -> (i32, i32) {
    %c0_i32 = arith.constant 0 : i32
    return %arg0, %arg1 : i32, i32
  }
  func.func @transform_2(%arg0: i32, %arg1: i32) -> (i32, i32) {
    %c0_i32 = arith.constant 0 : i32
    %c0_i32_0 = arith.constant 0 : i32
    return %c0_i32, %arg1 : i32, i32
  }
  func.func @transform_3(%arg0: i32, %arg1: i32) -> (i32, i32) {
    %c0_i32 = arith.constant 0 : i32
    %c0_i32_0 = arith.constant 0 : i32
    return %c0_i32, %arg1 : i32, i32
  }
  func.func @transform_4(%arg0: i32, %arg1: i32) -> (i32, i32) {
    %c0_i32 = arith.constant 0 : i32
    return %arg0, %arg1 : i32, i32
  }
}

</mosaic_0001>

<llo_original>
// kernel: tpu_custom_call.1
$region0: #{tpu_custom_call.1}
  #allocation0 [shape = 'u32[]', space=smem, size = 0x4, offset = 0x4, fixed_abs, tag = 'smem constant byte address 0x4 - core index']
  #allocation1 [shape = 'u32[144,128]{1,0:T(1,128)}', space=vmem, size = 0x12000, scoped, tag = 'internal scratch']
  %s0 = inlined_call_operand.hbm [shape: f32[16,128], index: 0, kind: input, shape index: {}]
  %s1 = inlined_call_operand.hbm [shape: f32[16,128], index: 1, kind: input, shape index: {}]
  %s2 = inlined_call_operand.hbm [shape: f32[128,128], index: 2, kind: input, shape index: {}]
  %s3 = inlined_call_operand.vmem [shape: f32[1,128], index: 3, kind: input, shape index: {}]
  %s4 = inlined_call_operand.hbm [shape: f32[16,128], index: 4, kind: output, shape index: {}]
  %s5 = sld [smem:[#allocation0]]
  $region38: #{tpu_custom_call.1} parent=0
    _
  %s7 = ssub.s32 1, %s5
  %s8 = scalar_select 0, %s7, %s5
  $region1: #{tpu_custom_call.1} parent=0
    #allocation2 [shape = 'u8[8192]{0}', space=vmem, size = 0x2000, scoped, tag = 'input window, operand 0, single buffered']
    #allocation3 [shape = 's32[1]{0}', space=sflag, size = 0x4, scoped, tag = 'scoped memory for tpu_custom_call.1']
    #allocation4 [shape = 's32[1]{0}', space=sflag, size = 0x4, scoped, tag = 'scoped memory for tpu_custom_call.1']
    #allocation5 [shape = 'u8[8192]{0}', space=vmem, size = 0x2000, scoped, tag = 'input window, operand 1, single buffered']
    #allocation6 [shape = 's32[1]{0}', space=sflag, size = 0x4, scoped, tag = 'scoped memory for tpu_custom_call.1']
    #allocation7 [shape = 'u8[65536]{0}', space=vmem, size = 0x10000, scoped, tag = 'input window, operand 2, single buffered']
    #allocation8 [shape = 'u8[8192]{0}', space=vmem, size = 0x2000, scoped, tag = 'output window, operand 0, single buffered']
    %9 = vsyncpa [#allocation3], 0
    %10 = vsyncpa [#allocation6], 0
    %11 = vsyncpa [#allocation4], 0
    // Predicated region
    $region2: #{tpu_custom_call.1} parent=1 // pred_check
      _
    $region3: #{tpu_custom_call.1} parent=1 // pred_check_branch
      %13 = sbr.rel (0) target = $region5
    $region4: #{tpu_custom_call.1} parent=1 // pred_region
      %s15 = ssub.s32 256, 256
      %16 = vsyncadd [#allocation3], %s15
      %s17 = sshll.u32 [#allocation2], 4
      %s18 = int_to_ptr.vmem [resolvable:$true] %s17
      %23 = dma.hbm_to_vmem [thread:$0]  %s0, 256, %s18, [#allocation3], 128, 128, 8
    $region5: #{tpu_custom_call.1} parent=1 // pred_fallthru
      _
    // Predicated region
    $region6: #{tpu_custom_call.1} parent=1 // pred_check
      _
    $region7: #{tpu_custom_call.1} parent=1 // pred_check_branch
      %25 = sbr.rel (0) target = $region9
    $region8: #{tpu_custom_call.1} parent=1 // pred_region
      %s27 = ssub.s32 256, 256
      %28 = vsyncadd [#allocation6], %s27
      %s29 = sshll.u32 [#allocation5], 4
      %s30 = int_to_ptr.vmem [resolvable:$true] %s29
      %35 = dma.hbm_to_vmem [thread:$0]  %s1, 256, %s30, [#allocation6], 128, 128, 8
    $region9: #{tpu_custom_call.1} parent=1 // pred_fallthru
      _
    // Predicated region
    $region10: #{tpu_custom_call.1} parent=1 // pred_check
      _
    $region11: #{tpu_custom_call.1} parent=1 // pred_check_branch
      %37 = sbr.rel (0) target = $region13
    $region12: #{tpu_custom_call.1} parent=1 // pred_region
      %s39 = ssub.s32 2048, 2048
      %40 = vsyncadd [#allocation6], %s39
      %s41 = sshll.u32 [#allocation7], 4
      %s42 = int_to_ptr.vmem [resolvable:$true] %s41
      %47 = dma.hbm_to_vmem [thread:$0]  %s2, 2048, %s42, [#allocation6], 128, 128, 8
    $region13: #{tpu_custom_call.1} parent=1 // pred_fallthru
      _
    // Predicated region
    $region14: #{tpu_custom_call.1} parent=1 // pred_check
      _
    $region15: #{tpu_custom_call.1} parent=1 // pred_check_branch
      %49 = sbr.rel (0) target = $region17
    $region16: #{tpu_custom_call.1} parent=1 // pred_region
      _
    $region17: #{tpu_custom_call.1} parent=1 // pred_fallthru
      _
    // Predicated region
    $region18: #{tpu_custom_call.1} parent=1 // pred_check
      _
    $region19: #{tpu_custom_call.1} parent=1 // pred_check_branch
      %51 = sbr.rel (0) target = $region21
    $region20: #{tpu_custom_call.1} parent=1 // pred_region
      %52 = dma.done [#allocation3], 256
    $region21: #{tpu_custom_call.1} parent=1 // pred_fallthru
      _
    // Predicated region
    $region22: #{tpu_custom_call.1} parent=1 // pred_check
      _
    $region23: #{tpu_custom_call.1} parent=1 // pred_check_branch
      %54 = sbr.rel (0) target = $region25
    $region24: #{tpu_custom_call.1} parent=1 // pred_region
      %55 = dma.done [#allocation6], 256
    $region25: #{tpu_custom_call.1} parent=1 // pred_fallthru
      _
    // Predicated region
    $region26: #{tpu_custom_call.1} parent=1 // pred_check
      _
    $region27: #{tpu_custom_call.1} parent=1 // pred_check_branch
      %57 = sbr.rel (0) target = $region29
    $region28: #{tpu_custom_call.1} parent=1 // pred_region
      %58 = dma.done [#allocation6], 2048
    $region29: #{tpu_custom_call.1} parent=1 // pred_fallthru
      _
    %v59 = vld [vmem:[#allocation2] sm:$0xff]
    %v60 = vld [vmem:[#allocation2 + $0x8] sm:$0xff]
    %v61 = vld [vmem:[#allocation7] sm:$0xff]
    %v62 = vld [vmem:[#allocation7 + $0x8] sm:$0xff]
    %v63 = vld [vmem:[#allocation7 + $0x10] sm:$0xff]
    %v64 = vld [vmem:[#allocation7 + $0x18] sm:$0xff]
    %v65 = vld [vmem:[#allocation7 + $0x20] sm:$0xff]
    %v66 = vld [vmem:[#allocation7 + $0x28] sm:$0xff]
    %v67 = vld [vmem:[#allocation7 + $0x30] sm:$0xff]
    %v68 = vld [vmem:[#allocation7 + $0x38] sm:$0xff]
    %v69 = vld [vmem:[#allocation7 + $0x40] sm:$0xff]
    %v70 = vld [vmem:[#allocation7 + $0x48] sm:$0xff]
    %v71 = vld [vmem:[#allocation7 + $0x50] sm:$0xff]
    %v72 = vld [vmem:[#allocation7 + $0x58] sm:$0xff]
    %v73 = vld [vmem:[#allocation7 + $0x60] sm:$0xff]
    %v74 = vld [vmem:[#allocation7 + $0x68] sm:$0xff]
    %v75 = vld [vmem:[#allocation7 + $0x70] sm:$0xff]
    %v76 = vld [vmem:[#allocation7 + $0x78] sm:$0xff]
    %v77 = vld [vmem:[%s3] sm:$0x1]
    %v79 = vlaneseq
    %v80 = vshrl.u32 %v79, 7
    %v81 = vsub.s32 0, %v80
    %v82 = vrot.slane %v77, %v81
    %84 = vmatprep.subr.mxu0 0.0
    %85 = vmatpush1.msra.mxu0 %v61
    %86 = vmatprep.subr.mxu0 0.0
    %87 = vmatpush1.msra.mxu0 %v62
    %88 = vmatprep.subr.mxu0 0.0
    %89 = vmatpush1.msra.mxu0 %v63
    %90 = vmatprep.subr.mxu0 0.0
    %91 = vmatpush1.msra.mxu0 %v64
    %92 = vmatprep.subr.mxu0 0.0
    %93 = vmatpush1.msra.mxu0 %v65
    %94 = vmatprep.subr.mxu0 0.0
    %95 = vmatpush1.msra.mxu0 %v66
    %96 = vmatprep.subr.mxu0 0.0
    %97 = vmatpush1.msra.mxu0 %v67
    %98 = vmatprep.subr.mxu0 0.0
    %99 = vmatpush1.msra.mxu0 %v68
    %100 = vmatprep.subr.mxu0 0.0
    %101 = vmatpush1.msra.mxu0 %v69
    %102 = vmatprep.subr.mxu0 0.0
    %103 = vmatpush1.msra.mxu0 %v70
    %104 = vmatprep.subr.mxu0 0.0
    %105 = vmatpush1.msra.mxu0 %v71
    %106 = vmatprep.subr.mxu0 0.0
    %107 = vmatpush1.msra.mxu0 %v72
    %108 = vmatprep.subr.mxu0 0.0
    %109 = vmatpush1.msra.mxu0 %v73
    %110 = vmatprep.subr.mxu0 0.0
    %111 = vmatpush1.msra.mxu0 %v74
    %112 = vmatprep.subr.mxu0 0.0
    %113 = vmatpush1.msra.mxu0 %v75
    %114 = vmatprep.subr.mxu0 0.0
    %115 = vmatpush1.msra.mxu0 %v76
    %116 = vmatprep.subr.mxu0 0.0
    %117 = vmatpush1.msra.mxu0 0.0
    %118 = vmatprep.subr.mxu0 0.0
    %119 = vmatpush1.msra.mxu0 0.0
    %120 = vmatprep.subr.mxu0 0.0
    %121 = vmatpush1.msra.mxu0 0.0
    %122 = vmatprep.subr.mxu0 0.0
    %123 = vmatpush1.msra.mxu0 0.0
    %124 = vmatprep.subr.mxu0 0.0
    %125 = vmatpush1.msra.mxu0 0.0
    %126 = vmatprep.subr.mxu0 0.0
    %127 = vmatpush1.msra.mxu0 0.0
    %128 = vmatprep.subr.mxu0 0.0
    %129 = vmatpush1.msra.mxu0 0.0
    %130 = vmatprep.subr.mxu0 0.0
    %131 = vmatpush1.msra.mxu0 0.0
    %132 = vmatprep.subr.mxu0 0.0
    %133 = vmatpush1.msra.mxu0 0.0
    %134 = vmatprep.subr.mxu0 0.0
    %135 = vmatpush1.msra.mxu0 0.0
    %136 = vmatprep.subr.mxu0 0.0
    %137 = vmatpush1.msra.mxu0 0.0
    %138 = vmatprep.subr.mxu0 0.0
    %139 = vmatpush1.msra.mxu0 0.0
    %140 = vmatprep.subr.mxu0 0.0
    %141 = vmatpush1.msra.mxu0 0.0
    %142 = vmatprep.subr.mxu0 0.0
    %143 = vmatpush1.msra.mxu0 0.0
    %144 = vmatprep.subr.mxu0 0.0
    %145 = vmatpush1.msra.mxu0 0.0
    %146 = vmatprep.subr.mxu0 0.0
    %147 = vmatpush1.msra.mxu0 0.0
    %148 = vmatprep.mubr.f32.mxu0 0.0
    %149 = vmatmul.mubr.f32.gmra.mrb[0].mxu0 %v59
    %v150 = vpop.f32.mrb[0].mxu0
    %v151 = vadd.f32 %v82, %v150
    %v152 = vpop.f32.mrb[0].mxu0
    %153 = vmatprep.mubr.f32.mxu0 0.0
    %154 = vmatmul.mubr.f32.gmra.mrb[0].mxu0 %v60
    %v155 = vpop.f32.mrb[0].mxu0
    %v156 = vadd.f32 %v82, %v155
    %v157 = vpop.f32.mrb[0].mxu0
    %158 = vdwg.mxu0
    %v159 = vmul.f32 %v151, 0.5
    %v160 = vmul.f32 %v156, 0.5
    %v161 = vld [vmem:[#allocation5] sm:$0xff]
    %v162 = vld [vmem:[#allocation5 + $0x8] sm:$0xff]
    %v163 = vadd.f32 %v159, %v161
    %v164 = vadd.f32 %v160, %v162
    %165 = vst [vmem:[#allocation8] sm:$0xff] %v163
    %166 = vst [vmem:[#allocation8 + $0x8] sm:$0xff] %v164
    // Predicated region
    $region30: #{tpu_custom_call.1} parent=1 // pred_check
      _
    $region31: #{tpu_custom_call.1} parent=1 // pred_check_branch
      %168 = sbr.rel (0) target = $region33
    $region32: #{tpu_custom_call.1} parent=1 // pred_region
      %s170 = ssub.s32 256, 256
      %171 = vsyncadd [#allocation4], %s170
      %s172 = sshll.u32 [#allocation8], 4
      %s173 = int_to_ptr.vmem [resolvable:$true] %s172
      %178 = dma.vmem_to_hbm [thread:$0]  %s173, 256, %s4, [#allocation4], 128, 128, 8
    $region33: #{tpu_custom_call.1} parent=1 // pred_fallthru
      _
    // Predicated region
    $region34: #{tpu_custom_call.1} parent=1 // pred_check
      _
    $region35: #{tpu_custom_call.1} parent=1 // pred_check_branch
      %180 = sbr.rel (0) target = $region37
    $region36: #{tpu_custom_call.1} parent=1 // pred_region
      %181 = dma.done [#allocation4], 256
    $region37: #{tpu_custom_call.1} parent=1 // pred_fallthru
      _
    %182 = vsyncpa [#allocation3], 1
    %183 = vsyncpa [#allocation6], 1
    %184 = vsyncpa [#allocation4], 1

</llo_original>
